<compile_context>
chip_gen: v6e
topology: v6e:2x2x1
jax: 0.10.0
libtpu: 0.0.40
codegen_flags: <defaults>
</compile_context>

<pallas_src>
import functools

import jax
import jax.numpy as jnp
from jax.experimental import pallas as pl
from jax.experimental.pallas import tpu as pltpu


def _gumbel_softmax_kernel(x_ref, u_ref, o_ref, *, tau, straight_through):
    x = x_ref[...].astype(jnp.float32)
    u = u_ref[...]

    # ---- log_softmax over last axis (classes) ----
    m = jnp.max(x, axis=-1, keepdims=True)
    z = x - m
    lse = jnp.log(jnp.sum(jnp.exp(z), axis=-1, keepdims=True))
    log_ps = z - lse

    # ---- Gumbel(0,1) noise:  -log(-log(u)) ----
    # u in [0, 1) by construction; only guard against log(0).
    g = -jnp.log(-jnp.log(jnp.maximum(u, jnp.float32(1e-7))))

    y = log_ps + g

    if straight_through:
        # Forward value of (out_binary - out).detach() + out is out_binary.
        # softmax(y * 1e8) == one-hot of argmax(y), with exact ties split
        # uniformly -> compare/select + normalize (VPU/XLU only, no exp).
        # TODO(synk): gradient path (stop_gradient through `out`) is not
        # represented; this script implements the forward pass only.
        ymax = jnp.max(y, axis=-1, keepdims=True)
        mask = (y == ymax).astype(jnp.float32)
        out = mask / jnp.sum(mask, axis=-1, keepdims=True)
    else:
        # ---- soft sample: softmax(y / tau) over classes ----
        ys = y * jnp.float32(1.0 / tau)
        ym = jnp.max(ys, axis=-1, keepdims=True)
        e = jnp.exp(ys - ym)
        out = e / jnp.sum(e, axis=-1, keepdims=True)

    o_ref[...] = out.astype(o_ref.dtype)


def gumble_softmax(logits, key, *, tau=1.0, straight_through=False,
                   block_rows=1024):
    """Pallas TPU forward of GumbleSoftmax.

    Args:
      logits: (B, C) float array; softmax axis is the last axis (PyTorch dim=1).
      key:    jax.random key used to draw the Gumbel uniforms.
      block_rows: batch-tile size (rows per grid step); sweep for peak BW.
    """
    B, C = logits.shape

    # Uniform noise drawn on-device in the wrapper; streamed tile-by-tile
    # into the kernel alongside the logits.
    u = jax.random.uniform(key, (B, C), dtype=jnp.float32)

    # Batch tile: multiple of 8 sublanes (or the full batch).
    tb = min(int(block_rows), B)
    if tb < B:
        tb = max(8, (tb // 8) * 8)
    grid = (pl.cdiv(B, tb),)

    kernel = functools.partial(
        _gumbel_softmax_kernel, tau=float(tau),
        straight_through=straight_through,
    )
    return pl.pallas_call(
        kernel,
        out_shape=jax.ShapeDtypeStruct((B, C), logits.dtype),
        grid_spec=pltpu.PrefetchScalarGridSpec(
            num_scalar_prefetch=0,
            grid=grid,
            in_specs=[
                pl.BlockSpec((tb, C), lambda i: (i, 0)),  # logits tile
                pl.BlockSpec((tb, C), lambda i: (i, 0)),  # uniform-noise tile
            ],
            out_specs=pl.BlockSpec((tb, C), lambda i: (i, 0)),
        ),
        compiler_params=pltpu.CompilerParams(
            # Rows are independent -> shard tiles across TensorCores on v7x.
            dimension_semantics=("parallel",),
        ),
    )(logits, u)


if __name__ == "__main__":
    root = jax.random.PRNGKey(0)
    k_logits, k_noise = jax.random.split(root)

    # Small DivideMix-like shapes: 64 samples, 10 classes.
    B, C = 64, 10
    logits = jax.random.normal(k_logits, (B, C), dtype=jnp.float32)

    # block_rows=16 -> grid of 4 batch tiles, exercising the pipelined path.
    out = gumble_softmax(logits, k_noise, tau=0.5,
                         straight_through=False, block_rows=16)
    out = jax.block_until_ready(out)

    # sanity: rows are probability distributions
    row_sums = jnp.sum(out, axis=-1)
    assert out.shape == (B, C)
    assert bool(jnp.all(jnp.abs(row_sums - 1.0) < 1e-3))
    assert bool(jnp.all(out >= 0.0))

    # straight-through branch: rows are (tie-normalized) one-hots
    out_st = gumble_softmax(logits, k_noise, tau=0.5,
                            straight_through=True, block_rows=16)
    out_st = jax.block_until_ready(out_st)
    st_sums = jnp.sum(out_st, axis=-1)
    assert out_st.shape == (B, C)
    assert bool(jnp.all(jnp.abs(st_sums - 1.0) < 1e-3))
    assert bool(jnp.all(jnp.max(out_st, axis=-1) > 0.0))

    print("KERNEL_OK")
</pallas_src>

<mosaic_0001>
module attributes {stable_mosaic.version = 11 : i64} {
  func.func @_gumbel_softmax_kernel(%arg0: i32, %arg1: memref<16x10xf32, #tpu.memory_space<vmem>>, %arg2: memref<16x10xf32, #tpu.memory_space<vmem>>, %arg3: memref<16x10xf32, #tpu.memory_space<vmem>>) attributes {dimension_semantics = [#tpu.dimension_semantics<parallel>], iteration_bounds = array<i64: 4>, scalar_prefetch = 0 : i64, scratch_operands = 0 : i64, tpu.core_type = #tpu.core_type<tc>, window_params = [{transform_indices = @transform_0, window_bounds = array<i64: 16, 10>}, {transform_indices = @transform_1, window_bounds = array<i64: 16, 10>}, {transform_indices = @transform_2, window_bounds = array<i64: 16, 10>}]} {
    %c0 = arith.constant 0 : index
    %c0_0 = arith.constant 0 : index
    %0 = vector.load %arg1[%c0, %c0_0] : memref<16x10xf32, #tpu.memory_space<vmem>>, vector<16x10xf32>
    %c0_1 = arith.constant 0 : index
    %c0_2 = arith.constant 0 : index
    %1 = vector.load %arg2[%c0_1, %c0_2] : memref<16x10xf32, #tpu.memory_space<vmem>>, vector<16x10xf32>
    %cst = arith.constant dense<0xFF800000> : vector<16xf32>
    %2 = vector.multi_reduction <maximumf>, %0, %cst [1] : vector<16x10xf32> to vector<16xf32>
    %3 = vector.shape_cast %2 : vector<16xf32> to vector<16x1xf32>
    %4 = vector.broadcast %3 : vector<16x1xf32> to vector<16x10xf32>
    %5 = arith.subf %0, %4 : vector<16x10xf32>
    %6 = math.exp %5 : vector<16x10xf32>
    %cst_3 = arith.constant dense<0.000000e+00> : vector<16xf32>
    %7 = vector.multi_reduction <add>, %6, %cst_3 [1] : vector<16x10xf32> to vector<16xf32>
    %8 = vector.shape_cast %7 : vector<16xf32> to vector<16x1xf32>
    %9 = math.log %8 : vector<16x1xf32>
    %10 = vector.broadcast %9 : vector<16x1xf32> to vector<16x10xf32>
    %11 = arith.subf %5, %10 : vector<16x10xf32>
    %cst_4 = arith.constant 1.000000e-07 : f32
    %12 = vector.broadcast %cst_4 : f32 to vector<16x10xf32>
    %13 = arith.maximumf %1, %12 : vector<16x10xf32>
    %14 = math.log %13 : vector<16x10xf32>
    %cst_5 = arith.constant 0.000000e+00 : f32
    %15 = vector.broadcast %cst_5 : f32 to vector<16x10xf32>
    %16 = arith.subf %15, %14 : vector<16x10xf32>
    %17 = math.log %16 : vector<16x10xf32>
    %cst_6 = arith.constant 0.000000e+00 : f32
    %18 = vector.broadcast %cst_6 : f32 to vector<16x10xf32>
    %19 = arith.subf %18, %17 : vector<16x10xf32>
    %20 = arith.addf %11, %19 : vector<16x10xf32>
    %cst_7 = arith.constant 2.000000e+00 : f32
    %21 = vector.broadcast %cst_7 : f32 to vector<16x10xf32>
    %22 = arith.mulf %20, %21 : vector<16x10xf32>
    %cst_8 = arith.constant dense<0xFF800000> : vector<16xf32>
    %23 = vector.multi_reduction <maximumf>, %22, %cst_8 [1] : vector<16x10xf32> to vector<16xf32>
    %24 = vector.shape_cast %23 : vector<16xf32> to vector<16x1xf32>
    %25 = vector.broadcast %24 : vector<16x1xf32> to vector<16x10xf32>
    %26 = arith.subf %22, %25 : vector<16x10xf32>
    %27 = math.exp %26 : vector<16x10xf32>
    %cst_9 = arith.constant dense<0.000000e+00> : vector<16xf32>
    %28 = vector.multi_reduction <add>, %27, %cst_9 [1] : vector<16x10xf32> to vector<16xf32>
    %29 = vector.shape_cast %28 : vector<16xf32> to vector<16x1xf32>
    %30 = vector.broadcast %29 : vector<16x1xf32> to vector<16x10xf32>
    %31 = arith.divf %27, %30 : vector<16x10xf32>
    %c0_10 = arith.constant 0 : index
    %c0_11 = arith.constant 0 : index
    %32 = vector.load %arg3[%c0_10, %c0_11] : memref<16x10xf32, #tpu.memory_space<vmem>>, vector<16x10xf32>
    tpu.vector_store %arg3[%c0_10, %c0_11], %31 {strides = array<i32>} : memref<16x10xf32, #tpu.memory_space<vmem>>, vector<16x10xf32>,
    return
  }
  func.func @transform_0(%arg0: i32) -> (i32, i32) {
    %c0_i32 = arith.constant 0 : i32
    %c0_i32_0 = arith.constant 0 : i32
    return %arg0, %c0_i32 : i32, i32
  }
  func.func @transform_1(%arg0: i32) -> (i32, i32) {
    %c0_i32 = arith.constant 0 : i32
    %c0_i32_0 = arith.constant 0 : i32
    return %arg0, %c0_i32 : i32, i32
  }
  func.func @transform_2(%arg0: i32) -> (i32, i32) {
    %c0_i32 = arith.constant 0 : i32
    %c0_i32_0 = arith.constant 0 : i32
    return %arg0, %c0_i32 : i32, i32
  }
}

</mosaic_0001>

<llo_original>
// kernel: tpu_custom_call.1
$region0: #{tpu_custom_call.1}
  #allocation0 [shape = 'u32[]', space=smem, size = 0x4, offset = 0x4, fixed_abs, tag = 'smem constant byte address 0x4 - core index']
  #allocation1 [shape = 'u32[144,128]{1,0:T(1,128)}', space=vmem, size = 0x12000, scoped, tag = 'internal scratch']
  %s0 = inlined_call_operand.vmem [shape: f32[64,10], index: 0, kind: input, shape index: {}]
  %s1 = inlined_call_operand.vmem [shape: f32[64,10], index: 1, kind: input, shape index: {}]
  %s2 = inlined_call_operand.vmem [shape: f32[64,10], index: 2, kind: output, shape index: {}]
  %s3 = sld [smem:[#allocation0]]
  $region41: #{tpu_custom_call.1} parent=0
    _
  %s5 = ssub.s32 1, %s3
  %s6 = scalar_select 0, %s5, %s3
  loop: start=0, step=1, limit=6
  $region2: #{tpu_custom_call.1} parent=0 // loop_pre_header
    _
  $region3: #{tpu_custom_call.1} parent=0 // loop_header
    %s8 = sphi 0, %s12
    %p9 = scmp.ge.s32.totalorder %s8, 6
    %s18 = sphi 0, %s20
    %s21 = sphi 0, %s18
    %s22 = sphi 0, %s21
    %s38 = sphi 0, %s22
    %s44 = sphi 0, %s46
    %s47 = sphi 0, %s44
    %s48 = sphi 0, %s47
    %s64 = sphi 0, %s48
    %s70 = sphi 0, %s72
    %s73 = sphi 0, %s70
    %s74 = sphi 0, %s73
    %s90 = sphi 0, %s74
  $region4: #{tpu_custom_call.1} parent=0 // loop_header_branch
    %11 = sbr.rel (%p9) target = $region8
  $region5: #{tpu_custom_call.1} parent=0 // loop_body
    %s13 = ssub.s32 %s8, 1
    %s14 = ssub.s32 %s8, 2
    %s15 = sadd.s32 %s8, 1
    %s16 = ssub.s32 %s8, %s15
    %p17 = scmp.eq.s32.totalorder %s16, 0
    %s19 = sadd.s32 %s18, 1
    %s20 = scalar_select %p17, %s18, %s19
    %p23 = pneg %p17
    %p24 = scmp.eq.s32.totalorder %s8, 3
    %p25 = por %p23, %p24
    %p26 = scmp.ne.s32.totalorder %s18, %s21
    %p27 = scmp.eq.s32.totalorder %s8, 0
    %p28 = por %p26, %p27
    %p29 = scmp.ne.s32.totalorder %s18, %s21
    %p30 = scmp.eq.s32.totalorder %s13, 3
    %p31 = por %p29, %p30
    %p32 = scmp.ne.s32.totalorder %s21, %s22
    %p33 = scmp.eq.s32.totalorder %s13, 0
    %p34 = por %p32, %p33
    %p35 = scmp.ne.s32.totalorder %s21, %s22
    %p36 = scmp.eq.s32.totalorder %s14, 3
    %p37 = por %p35, %p36
    %p39 = scmp.ne.s32.totalorder %s22, %s38
    %p40 = scmp.eq.s32.totalorder %s14, 0
    %p41 = por %p39, %p40
    %s42 = ssub.s32 %s8, %s15
    %p43 = scmp.eq.s32.totalorder %s42, 0
    %s45 = sadd.s32 %s44, 1
    %s46 = scalar_select %p43, %s44, %s45
    %p49 = pneg %p43
    %p50 = scmp.eq.s32.totalorder %s8, 3
    %p51 = por %p49, %p50
    %p52 = scmp.ne.s32.totalorder %s44, %s47
    %p53 = scmp.eq.s32.totalorder %s8, 0
    %p54 = por %p52, %p53
    %p55 = scmp.ne.s32.totalorder %s44, %s47
    %p56 = scmp.eq.s32.totalorder %s13, 3
    %p57 = por %p55, %p56
    %p58 = scmp.ne.s32.totalorder %s47, %s48
    %p59 = scmp.eq.s32.totalorder %s13, 0
    %p60 = por %p58, %p59
    %p61 = scmp.ne.s32.totalorder %s47, %s48
    %p62 = scmp.eq.s32.totalorder %s14, 3
    %p63 = por %p61, %p62
    %p65 = scmp.ne.s32.totalorder %s48, %s64
    %p66 = scmp.eq.s32.totalorder %s14, 0
    %p67 = por %p65, %p66
    %s68 = ssub.s32 %s8, %s15
    %p69 = scmp.eq.s32.totalorder %s68, 0
    %s71 = sadd.s32 %s70, 1
    %s72 = scalar_select %p69, %s70, %s71
    %p75 = pneg %p69
    %p76 = scmp.eq.s32.totalorder %s8, 3
    %p77 = por %p75, %p76
    %p78 = scmp.ne.s32.totalorder %s70, %s73
    %p79 = scmp.eq.s32.totalorder %s8, 0
    %p80 = por %p78, %p79
    %p81 = scmp.ne.s32.totalorder %s70, %s73
    %p82 = scmp.eq.s32.totalorder %s13, 3
    %p83 = por %p81, %p82
    %p84 = scmp.ne.s32.totalorder %s73, %s74
    %p85 = scmp.eq.s32.totalorder %s13, 0
    %p86 = por %p84, %p85
    %p87 = scmp.ne.s32.totalorder %s73, %s74
    %p88 = scmp.eq.s32.totalorder %s14, 3
    %p89 = por %p87, %p88
    %p91 = scmp.ne.s32.totalorder %s74, %s90
    %p92 = scmp.eq.s32.totalorder %s14, 0
    %p93 = por %p91, %p92
    %p94 = scmp.le.s32.totalorder 1, %s8
    %p95 = scmp.lt.s32.totalorder %s8, 5
    %p96 = pnand %p94, %p95
    %p97 = pneg %p96
    // Predicated region
    $region9: #{tpu_custom_call.1} parent=5 // pred_check
      _
    $region10: #{tpu_custom_call.1} parent=5 // pred_check_branch
      %99 = sbr.rel (%p96) target = $region12
    $region11: #{tpu_custom_call.1} parent=5 // pred_region
      %s100 = ssub.s32 %s8, 1
    $region12: #{tpu_custom_call.1} parent=5 // pred_fallthru
      _
    %p101 = scmp.lt.s32.totalorder %s8, 4
    // Predicated region
    $region13: #{tpu_custom_call.1} parent=5 // pred_check
      %p102 = pneg %p101
    $region14: #{tpu_custom_call.1} parent=5 // pred_check_branch
      %104 = sbr.rel (%p102) target = $region16
    $region15: #{tpu_custom_call.1} parent=5 // pred_region
      // Predicated region
      $region17: #{tpu_custom_call.1} parent=15 // pred_check
        %p105 = pneg %p28
      $region18: #{tpu_custom_call.1} parent=15 // pred_check_branch
        %107 = sbr.rel (%p105) target = $region20
      $region19: #{tpu_custom_call.1} parent=15 // pred_region
        %s108 = smul.u32 2, %s8
        %p109 = scmp.lt.s32.totalorder %s108, 7
        %s110 = scalar_select %p109, %s108, 7
        %s111 = smul.addr %s110, 8
        %s112 = scalar_lea.vmem %s0, %s111
        %s113 = smul.u32 2, %s8
      $region20: #{tpu_custom_call.1} parent=15 // pred_fallthru
        _
      // Predicated region
      $region21: #{tpu_custom_call.1} parent=15 // pred_check
        %p114 = pneg %p54
      $region22: #{tpu_custom_call.1} parent=15 // pred_check_branch
        %116 = sbr.rel (%p114) target = $region24
      $region23: #{tpu_custom_call.1} parent=15 // pred_region
        %s117 = smul.u32 2, %s8
        %p118 = scmp.lt.s32.totalorder %s117, 7
        %s119 = scalar_select %p118, %s117, 7
        %s120 = smul.addr %s119, 8
        %s121 = scalar_lea.vmem %s1, %s120
        %s122 = smul.u32 2, %s8
      $region24: #{tpu_custom_call.1} parent=15 // pred_fallthru
        _
    $region16: #{tpu_custom_call.1} parent=5 // pred_fallthru
      _
    %p123 = scmp.le.s32.totalorder 1, %s8
    %p124 = scmp.lt.s32.totalorder %s8, 5
    %p125 = pnand %p123, %p124
    %p126 = pneg %p125
    // Predicated region
    $region25: #{tpu_custom_call.1} parent=5 // pred_check
      _
    $region26: #{tpu_custom_call.1} parent=5 // pred_check_branch
      %128 = sbr.rel (%p125) target = $region28
    $region27: #{tpu_custom_call.1} parent=5 // pred_region
      %s129 = ssub.s32 %s8, 1
      %s130 = smul.u32 2, %s13
      %p131 = scmp.lt.s32.totalorder %s130, 7
      %s132 = scalar_select %p131, %s130, 7
      %s133 = smul.addr %s132, 8
      %s134 = scalar_lea.vmem %s0, %s133
      %p135 = pneg %p34
      %p136 = pneg %p31
      %s137 = smul.u32 2, %s13
      %p138 = scmp.lt.s32.totalorder %s137, 7
      %s139 = scalar_select %p138, %s137, 7
      %s140 = smul.addr %s139, 8
      %s141 = scalar_lea.vmem %s1, %s140
      %p142 = pneg %p60
      %p143 = pneg %p57
      %p144 = pneg %p86
      %p145 = pneg %p83
      %s146 = smul.u32 2, %s13
      %p147 = scmp.lt.s32.totalorder %s146, 7
      %s148 = scalar_select %p147, %s146, 7
      %s149 = smul.addr %s148, 8
      %s150 = scalar_lea.vmem %s2, %s149
      %s151 = smul.u32 2, %s13
      %p152 = scmp.lt.s32.totalorder %s151, 7
      %s153 = scalar_select %p152, %s151, 7
      %s154 = smul.addr %s153, 8
      %s155 = scalar_lea.vmem %s0, %s154
      %s156 = smul.u32 2, %s13
      %s157 = smul.u32 2, %s13
      %p158 = scmp.lt.s32.totalorder %s157, 7
      %s159 = scalar_select %p158, %s157, 7
      %s160 = smul.addr %s159, 8
      %s161 = scalar_lea.vmem %s1, %s160
      %s162 = smul.u32 2, %s13
      %s163 = smul.u32 2, %s13
      %p164 = scmp.lt.s32.totalorder %s163, 7
      %s165 = scalar_select %p164, %s163, 7
      %s166 = smul.addr %s165, 8
      %s167 = scalar_lea.vmem %s2, %s166
      %s168 = smul.u32 2, %s13
      %v169 = vld [vmem:[%s155] sm:$0xff]
      %v170 = vld [vmem:[%s155 + $0x8] sm:$0xff]
      %v171 = vld [vmem:[%s161] sm:$0xff]
      %v172 = vld [vmem:[%s161 + $0x8] sm:$0xff]
      %vm173 = vcmask 80896
      %v174 = vsel %vm173, %v169, -inf
      %175 = vmax.xlane.f32.xlu0 %v174
      %v176 = vpop.xlane.xlu0 %175
      %v177 = vsel %vm173, %v170, -inf
      %178 = vmax.xlane.f32.xlu0 %v177
      %v179 = vpop.xlane.xlu0 %178
      %v180 = vsub.f32 %v169, %v176
      %v181 = vsub.f32 %v170, %v179
      %v182 = vmul.f32 %v180, 1.442695
      %v183 = vpow.pop %v182
      %v184 = vmul.f32 %v181, 1.442695
      %v185 = vpow.pop %v184
      %v186 = vsel %vm173, %v183, 0.0
      %187 = vadd.xlane.f32.xlu0 %v186
      %v188 = vpop.xlane.xlu0 %187
      %v189 = vsel %vm173, %v185, 0.0
      %190 = vadd.xlane.f32.xlu0 %v189
      %v191 = vpop.xlane.xlu0 %190
      %v192 = vlog2.pop %v188
      %v193 = vmul.f32 %v192, 0.6931472
      %v194 = vlog2.pop %v191
      %v195 = vmul.f32 %v194, 0.6931472
      %v196 = vsub.f32 %v180, %v193
      %v197 = vsub.f32 %v181, %v195
      %v198 = vmax.f32 %v171, 1e-07
      %v199 = vmax.f32 %v172, 1e-07
      %v200 = vlog2.pop %v198
      %v201 = vmul.f32 %v200, 0.6931472
      %v202 = vlog2.pop %v199
      %v203 = vmul.f32 %v202, 0.6931472
      %v204 = vsub.f32 0.0, %v201
      %v205 = vsub.f32 0.0, %v203
      %v206 = vlog2.pop %v204
      %v207 = vmul.f32 %v206, 0.6931472
      %v208 = vlog2.pop %v205
      %v209 = vmul.f32 %v208, 0.6931472
      %v210 = vsub.f32 0.0, %v207
      %v211 = vsub.f32 0.0, %v209
      %v212 = vadd.f32 %v196, %v210
      %v213 = vadd.f32 %v197, %v211
      %v214 = vmul.f32 %v212, 2.0
      %v215 = vmul.f32 %v213, 2.0
      %v216 = vsel %vm173, %v214, -inf
      %217 = vmax.xlane.f32.xlu0 %v216
      %v218 = vpop.xlane.xlu0 %217
      %v219 = vsel %vm173, %v215, -inf
      %220 = vmax.xlane.f32.xlu0 %v219
      %v221 = vpop.xlane.xlu0 %220
      %v222 = vsub.f32 %v214, %v218
      %v223 = vsub.f32 %v215, %v221
      %v224 = vmul.f32 %v222, 1.442695
      %v225 = vpow.pop %v224
      %v226 = vmul.f32 %v223, 1.442695
      %v227 = vpow.pop %v226
      %v228 = vsel %vm173, %v225, 0.0
      %229 = vadd.xlane.f32.xlu0 %v228
      %v230 = vpop.xlane.xlu0 %229
      %v231 = vsel %vm173, %v227, 0.0
      %232 = vadd.xlane.f32.xlu0 %v231
      %v233 = vpop.xlane.xlu0 %232
      %v234 = vrcp.pop %v230
      %v235 = vmul.f32 %v225, %v234
      %v236 = vrcp.pop %v233
      %v237 = vmul.f32 %v227, %v236
      %238 = vst.msk [vmem:[%s167] sm:$0xff] %vm173, %v235
      %239 = vst.msk [vmem:[%s167 + $0x8] sm:$0xff] %vm173, %v237
      %s240 = smul.u32 2, %s13
      %p241 = scmp.lt.s32.totalorder %s240, 7
      %s242 = scalar_select %p241, %s240, 7
      %s243 = smul.addr %s242, 8
      %s244 = scalar_lea.vmem %s2, %s243
      // Predicated region
      $region29: #{tpu_custom_call.1} parent=27 // pred_check
        %p245 = pneg %p83
      $region30: #{tpu_custom_call.1} parent=27 // pred_check_branch
        %247 = sbr.rel (%p245) target = $region32
      $region31: #{tpu_custom_call.1} parent=27 // pred_region
        %s248 = smul.u32 2, %s13
      $region32: #{tpu_custom_call.1} parent=27 // pred_fallthru
        _
    $region28: #{tpu_custom_call.1} parent=5 // pred_fallthru
      _
    %p249 = scmp.le.s32.totalorder 2, %s8
    // Predicated region
    $region33: #{tpu_custom_call.1} parent=5 // pred_check
      %p250 = pneg %p249
    $region34: #{tpu_custom_call.1} parent=5 // pred_check_branch
      %252 = sbr.rel (%p250) target = $region36
    $region35: #{tpu_custom_call.1} parent=5 // pred_region
      %s253 = ssub.s32 %s8, 2
      // Predicated region
      $region37: #{tpu_custom_call.1} parent=35 // pred_check
        %p254 = pneg %p89
      $region38: #{tpu_custom_call.1} parent=35 // pred_check_branch
        %256 = sbr.rel (%p254) target = $region40
      $region39: #{tpu_custom_call.1} parent=35 // pred_region
        %s257 = smul.u32 2, %s14
        %p258 = scmp.lt.s32.totalorder %s257, 7
        %s259 = scalar_select %p258, %s257, 7
        %s260 = smul.addr %s259, 8
        %s261 = scalar_lea.vmem %s2, %s260
      $region40: #{tpu_custom_call.1} parent=35 // pred_fallthru
        _
    $region36: #{tpu_custom_call.1} parent=5 // pred_fallthru
      _
  $region6: #{tpu_custom_call.1} parent=0 // loop_footer
    %s12 = sadd.s32 1, %s8
  $region7: #{tpu_custom_call.1} parent=0 // loop_footer_branch
    %7 = sbr.rel target = $region3
  $region8: #{tpu_custom_call.1} parent=0 // loop_exit
    _

</llo_original>
